<compile_context>
chip_gen: v7x
topology: tpu7x:2x2x1
jax: 0.10.0
libtpu: 0.0.40
codegen_flags: <defaults>
</compile_context>

<pallas_src>
import jax
import jax.numpy as jnp
from jax.experimental import pallas as pl
from jax.experimental.pallas import tpu as pltpu

LOG_STD_MAX = 2.0
LOG_STD_MIN = -5.0
HIDDEN = 256

# LOG_STD_MIN + 0.5*(MAX-MIN)*(tanh(z)+1)  ==  SCALE*tanh(z) + SHIFT  (one FMA)
_LOGSTD_SCALE = 0.5 * (LOG_STD_MAX - LOG_STD_MIN)
_LOGSTD_SHIFT = LOG_STD_MIN + _LOGSTD_SCALE


def actor_kernel(x_ref, w1_ref, w2h_ref, b_ref, out_ref):
    # Static slices of the packed weight / bias buffers.
    w1 = w1_ref[...]                       # (obs_dim, HIDDEN)
    w2 = w2h_ref[:, :HIDDEN]               # (HIDDEN, HIDDEN)
    wh = w2h_ref[:, HIDDEN:]               # (HIDDEN, 2*act_dim)  fused heads
    b1 = b_ref[:, :HIDDEN]                 # (1, HIDDEN)
    b2 = b_ref[:, HIDDEN:2 * HIDDEN]       # (1, HIDDEN)
    bh = b_ref[:, 2 * HIDDEN:]             # (1, 2*act_dim)

    x = x_ref[...]

    # fc1 + ReLU   (MXU accumulates in f32; bias/ReLU in f32 on the VPU)
    h1 = jnp.maximum(jnp.dot(x, w1, preferred_element_type=jnp.float32) + b1, 0.0)

    # fc2 + ReLU
    h2 = jnp.maximum(
        jnp.dot(h1.astype(w2.dtype), w2, preferred_element_type=jnp.float32) + b2, 0.0)

    # fused heads: z = [mean_pre | logstd_pre]
    z = jnp.dot(h2.astype(wh.dtype), wh, preferred_element_type=jnp.float32) + bh

    act_dim = out_ref.shape[-1] // 2
    squashed = _LOGSTD_SCALE * jnp.tanh(z) + _LOGSTD_SHIFT
    col = jax.lax.broadcasted_iota(jnp.int32, z.shape, dimension=1)
    # lanes [0, act_dim): mean (raw);  lanes [act_dim, 2*act_dim): squashed log_std
    out_ref[...] = jnp.where(col < act_dim, z, squashed)


def pack_params(p, matmul_dtype=jnp.float32):
    """Pack unpacked Linear params into the kernel's fused/packed buffers."""
    w2h = jnp.concatenate([p["w2"], p["wm"], p["ws"]], axis=1)          # (H, H+2A)
    b_all = jnp.concatenate([p["b1"], p["b2"], p["bm"], p["bs"]], axis=1)  # (1, 2H+2A)
    return dict(
        w1=p["w1"].astype(matmul_dtype),
        w2h=w2h.astype(matmul_dtype),
        b_all=b_all.astype(jnp.float32),   # biases stay f32 (VPU path)
        act_dim=int(p["wm"].shape[1]),
    )


def actor_forward(x, packed, *, block_batch=512):
    """x: (batch, obs_dim). Returns (mean, log_std), each (batch, act_dim), f32."""
    batch, obs_dim = x.shape
    w1, w2h, b_all = packed["w1"], packed["w2h"], packed["b_all"]
    act_dim = packed["act_dim"]
    two_act = 2 * act_dim
    assert w2h.shape == (HIDDEN, HIDDEN + two_act)
    assert b_all.shape == (1, 2 * HIDDEN + two_act)

    tb = min(batch, block_batch)
    grid = (pl.cdiv(batch, tb),)
    const = lambda i: (0, 0)   # weights / biases: VMEM-resident, never re-fetched

    out = pl.pallas_call(
        actor_kernel,
        out_shape=jax.ShapeDtypeStruct((batch, two_act), jnp.float32),
        grid_spec=pltpu.PrefetchScalarGridSpec(
            num_scalar_prefetch=0,
            grid=grid,
            in_specs=[
                pl.BlockSpec((tb, obs_dim), lambda i: (i, 0)),  # activations streamed
                pl.BlockSpec(w1.shape, const),
                pl.BlockSpec(w2h.shape, const),
                pl.BlockSpec(b_all.shape, const),
            ],
            out_specs=pl.BlockSpec((tb, two_act), lambda i: (i, 0)),
        ),
        compiler_params=pltpu.CompilerParams(
            dimension_semantics=("parallel",)),   # dual-TC split on v7x; no-op on v5e/v6e
    )(x.astype(w1.dtype), w1, w2h, b_all)

    return out[:, :act_dim], out[:, act_dim:]


def init_params(key, obs_dim, act_dim):
    """Deterministic init mimicking nn.Linear's U(-1/sqrt(fan_in), 1/sqrt(fan_in))."""
    def linear(k, fan_in, fan_out):
        kw, kb = jax.random.split(k)
        bound = 1.0 / jnp.sqrt(jnp.float32(fan_in))
        w = jax.random.uniform(kw, (fan_in, fan_out), jnp.float32, -bound, bound)
        b = jax.random.uniform(kb, (1, fan_out), jnp.float32, -bound, bound)
        return w, b

    k1, k2, k3, k4 = jax.random.split(key, 4)
    w1, b1 = linear(k1, obs_dim, HIDDEN)
    w2, b2 = linear(k2, HIDDEN, HIDDEN)
    wm, bm = linear(k3, HIDDEN, act_dim)
    ws, bs = linear(k4, HIDDEN, act_dim)
    return dict(w1=w1, b1=b1, w2=w2, b2=b2, wm=wm, bm=bm, ws=ws, bs=bs)


def actor_reference(x, p):
    h1 = jnp.maximum(x @ p["w1"] + p["b1"], 0.0)
    h2 = jnp.maximum(h1 @ p["w2"] + p["b2"], 0.0)
    mean = h2 @ p["wm"] + p["bm"]
    log_std = jnp.tanh(h2 @ p["ws"] + p["bs"])
    log_std = LOG_STD_MIN + 0.5 * (LOG_STD_MAX - LOG_STD_MIN) * (log_std + 1.0)
    return mean, log_std


# TODO(synk): Actor.get_action (Normal rsample / log_prob / action rescale) is a
# sampling routine outside forward(); not implemented as a kernel here.

if __name__ == "__main__":
    # Small synthetic env: obs_dim=16, act_dim=4, batch=8.
    batch, obs_dim, act_dim = 8, 16, 4

    key = jax.random.PRNGKey(0)
    k_params, k_x = jax.random.split(key)
    params = init_params(k_params, obs_dim, act_dim)
    x = jax.random.normal(k_x, (batch, obs_dim), jnp.float32)

    ref_mean, ref_log_std = actor_reference(x, params)

    # f32 path (exact-semantics check against the reference).
    packed_f32 = pack_params(params, jnp.float32)
    mean, log_std = actor_forward(x, packed_f32)
    jax.block_until_ready((mean, log_std))
    assert mean.shape == (batch, act_dim) and log_std.shape == (batch, act_dim)
    assert jnp.allclose(mean, ref_mean, atol=1e-4, rtol=1e-4)
    assert jnp.allclose(log_std, ref_log_std, atol=1e-4, rtol=1e-4)

    # bf16 matmul-input path (v6e/v7x DMA/MXU-friendly; f32 accumulation), loose check.
    packed_bf16 = pack_params(params, jnp.bfloat16)
    mean_b, log_std_b = actor_forward(x, packed_bf16)
    jax.block_until_ready((mean_b, log_std_b))
    assert jnp.allclose(mean_b, ref_mean, atol=5e-2, rtol=5e-2)
    assert jnp.allclose(log_std_b, ref_log_std, atol=5e-2, rtol=5e-2)

    print("KERNEL_OK")
</pallas_src>

<mosaic_0001>
module attributes {stable_mosaic.version = 11 : i64} {
  func.func @actor_kernel(%arg0: i32, %arg1: memref<8x16xf32, #tpu.memory_space<vmem>>, %arg2: memref<16x256xf32, #tpu.memory_space<vmem>>, %arg3: memref<256x264xf32, #tpu.memory_space<vmem>>, %arg4: memref<1x520xf32, #tpu.memory_space<vmem>>, %arg5: memref<8x8xf32, #tpu.memory_space<vmem>>) attributes {dimension_semantics = [#tpu.dimension_semantics<parallel>], iteration_bounds = array<i64: 1>, scalar_prefetch = 0 : i64, scratch_operands = 0 : i64, tpu.core_type = #tpu.core_type<tc>, window_params = [{transform_indices = @transform_0, window_bounds = array<i64: 8, 16>}, {pipeline_mode = #tpu.pipeline_mode<synchronous>, transform_indices = @transform_1, window_bounds = array<i64: 16, 256>}, {pipeline_mode = #tpu.pipeline_mode<synchronous>, transform_indices = @transform_2, window_bounds = array<i64: 256, 264>}, {pipeline_mode = #tpu.pipeline_mode<synchronous>, transform_indices = @transform_3, window_bounds = array<i64: 1, 520>}, {transform_indices = @transform_4, window_bounds = array<i64: 8, 8>}]} {
    %c0 = arith.constant 0 : index
    %c0_0 = arith.constant 0 : index
    %0 = vector.load %arg2[%c0, %c0_0] : memref<16x256xf32, #tpu.memory_space<vmem>>, vector<16x256xf32>
    %c0_1 = arith.constant 0 : index
    %c0_2 = arith.constant 0 : index
    %1 = vector.load %arg3[%c0_1, %c0_2] : memref<256x264xf32, #tpu.memory_space<vmem>>, vector<256x256xf32>
    %c0_3 = arith.constant 0 : index
    %c256 = arith.constant 256 : index
    %2 = vector.load %arg3[%c0_3, %c256] : memref<256x264xf32, #tpu.memory_space<vmem>>, vector<256x8xf32>
    %c0_4 = arith.constant 0 : index
    %c0_5 = arith.constant 0 : index
    %3 = vector.load %arg4[%c0_4, %c0_5] : memref<1x520xf32, #tpu.memory_space<vmem>>, vector<1x256xf32>
    %c0_6 = arith.constant 0 : index
    %c256_7 = arith.constant 256 : index
    %4 = vector.load %arg4[%c0_6, %c256_7] : memref<1x520xf32, #tpu.memory_space<vmem>>, vector<1x256xf32>
    %c0_8 = arith.constant 0 : index
    %c512 = arith.constant 512 : index
    %5 = vector.load %arg4[%c0_8, %c512] : memref<1x520xf32, #tpu.memory_space<vmem>>, vector<1x8xf32>
    %c0_9 = arith.constant 0 : index
    %c0_10 = arith.constant 0 : index
    %6 = vector.load %arg1[%c0_9, %c0_10] : memref<8x16xf32, #tpu.memory_space<vmem>>, vector<8x16xf32>
    %cst = arith.constant dense<0.000000e+00> : vector<8x256xf32>
    %7 = tpu.matmul %6, %0, %cst {dimension_numbers = #tpu.dot_dimension_numbers<[1], [0], [0], [1], [0, 0, 1, 1], [], []>} : vector<8x16xf32>, vector<16x256xf32>, vector<8x256xf32> -> vector<8x256xf32>
    %8 = vector.broadcast %3 : vector<1x256xf32> to vector<8x256xf32>
    %9 = arith.addf %7, %8 : vector<8x256xf32>
    %cst_11 = arith.constant 0.000000e+00 : f32
    %10 = vector.broadcast %cst_11 : f32 to vector<8x256xf32>
    %11 = arith.maximumf %9, %10 : vector<8x256xf32>
    %cst_12 = arith.constant dense<0.000000e+00> : vector<8x256xf32>
    %12 = tpu.matmul %11, %1, %cst_12 {dimension_numbers = #tpu.dot_dimension_numbers<[1], [0], [0], [1], [0, 0, 1, 1], [], []>} : vector<8x256xf32>, vector<256x256xf32>, vector<8x256xf32> -> vector<8x256xf32>
    %13 = vector.broadcast %4 : vector<1x256xf32> to vector<8x256xf32>
    %14 = arith.addf %12, %13 : vector<8x256xf32>
    %cst_13 = arith.constant 0.000000e+00 : f32
    %15 = vector.broadcast %cst_13 : f32 to vector<8x256xf32>
    %16 = arith.maximumf %14, %15 : vector<8x256xf32>
    %cst_14 = arith.constant dense<0.000000e+00> : vector<8x8xf32>
    %17 = tpu.matmul %16, %2, %cst_14 {dimension_numbers = #tpu.dot_dimension_numbers<[1], [0], [0], [1], [0, 0, 1, 1], [], []>} : vector<8x256xf32>, vector<256x8xf32>, vector<8x8xf32> -> vector<8x8xf32>
    %18 = vector.broadcast %5 : vector<1x8xf32> to vector<8x8xf32>
    %19 = arith.addf %17, %18 : vector<8x8xf32>
    %20 = math.tanh %19 : vector<8x8xf32>
    %cst_15 = arith.constant 3.500000e+00 : f32
    %21 = vector.broadcast %cst_15 : f32 to vector<8x8xf32>
    %22 = arith.mulf %21, %20 : vector<8x8xf32>
    %cst_16 = arith.constant -1.500000e+00 : f32
    %23 = vector.broadcast %cst_16 : f32 to vector<8x8xf32>
    %24 = arith.addf %22, %23 : vector<8x8xf32>
    %25 = tpu.iota {dimensions = array<i32: 1>} : vector<8x8xi32>
    %c4_i32 = arith.constant 4 : i32
    %26 = vector.broadcast %c4_i32 : i32 to vector<8x8xi32>
    %27 = arith.cmpi slt, %25, %26 : vector<8x8xi32>
    %28 = arith.select %27, %19, %24 : vector<8x8xi1>, vector<8x8xf32>
    %c0_17 = arith.constant 0 : index
    %c0_18 = arith.constant 0 : index
    %29 = vector.load %arg5[%c0_17, %c0_18] : memref<8x8xf32, #tpu.memory_space<vmem>>, vector<8x8xf32>
    tpu.vector_store %arg5[%c0_17, %c0_18], %28 {strides = array<i32>} : memref<8x8xf32, #tpu.memory_space<vmem>>, vector<8x8xf32>,
    return
  }
  func.func @transform_0(%arg0: i32) -> (i32, i32) {
    %c0_i32 = arith.constant 0 : i32
    %c0_i32_0 = arith.constant 0 : i32
    return %arg0, %c0_i32 : i32, i32
  }
  func.func @transform_1(%arg0: i32) -> (i32, i32) {
    %c0_i32 = arith.constant 0 : i32
    %c0_i32_0 = arith.constant 0 : i32
    %c0_i32_1 = arith.constant 0 : i32
    return %c0_i32, %c0_i32_0 : i32, i32
  }
  func.func @transform_2(%arg0: i32) -> (i32, i32) {
    %c0_i32 = arith.constant 0 : i32
    %c0_i32_0 = arith.constant 0 : i32
    %c0_i32_1 = arith.constant 0 : i32
    return %c0_i32, %c0_i32_0 : i32, i32
  }
  func.func @transform_3(%arg0: i32) -> (i32, i32) {
    %c0_i32 = arith.constant 0 : i32
    %c0_i32_0 = arith.constant 0 : i32
    %c0_i32_1 = arith.constant 0 : i32
    return %c0_i32, %c0_i32_0 : i32, i32
  }
  func.func @transform_4(%arg0: i32) -> (i32, i32) {
    %c0_i32 = arith.constant 0 : i32
    %c0_i32_0 = arith.constant 0 : i32
    return %arg0, %c0_i32 : i32, i32
  }
}

</mosaic_0001>

<llo_original>
// kernel: tpu_custom_call.1
$region0: #{tpu_custom_call.1}
  #allocation0 [shape = 'u32[]', space=smem, size = 0x4, offset = 0x4, fixed_abs, tag = 'smem constant byte address 0x4 - core index']
  #allocation1 [shape = 'u32[144,128]{1,0:T(1,128)}', space=vmem, size = 0x12000, scoped, tag = 'internal scratch']
  %s0 = inlined_call_operand.vmem [shape: f32[8,16], index: 0, kind: input, shape index: {}]
  %s1 = inlined_call_operand.vmem [shape: f32[16,256], index: 1, kind: input, shape index: {}]
  %s2 = inlined_call_operand.vmem [shape: f32[256,264], index: 2, kind: input, shape index: {}]
  %s3 = inlined_call_operand.vmem [shape: f32[1,520], index: 3, kind: input, shape index: {}]
  %s4 = inlined_call_operand.hbm [shape: f32[8,8], index: 4, kind: output, shape index: {}]
  %s5 = sld [smem:[#allocation0]]
  $region26: #{tpu_custom_call.1} parent=0
    _
  %s7 = ssub.s32 1, %s5
  %s8 = scalar_select 0, %s7, %s5
  $region1: #{tpu_custom_call.1} parent=0
    #allocation2 [shape = 'u8[4096]{0}', space=vmem, size = 0x1000, scoped, tag = 'output window, operand 0, single buffered']
    #allocation3 [shape = 's32[1]{0}', space=sflag, size = 0x4, scoped, tag = 'scoped memory for tpu_custom_call.1']
    %9 = vsyncpa [#allocation3], 0
    // Predicated region
    $region2: #{tpu_custom_call.1} parent=1 // pred_check
      _
    $region3: #{tpu_custom_call.1} parent=1 // pred_check_branch
      %11 = sbr.rel (0) target = $region5
    $region4: #{tpu_custom_call.1} parent=1 // pred_region
      _
    $region5: #{tpu_custom_call.1} parent=1 // pred_fallthru
      _
    // Predicated region
    $region6: #{tpu_custom_call.1} parent=1 // pred_check
      _
    $region7: #{tpu_custom_call.1} parent=1 // pred_check_branch
      %13 = sbr.rel (0) target = $region9
    $region8: #{tpu_custom_call.1} parent=1 // pred_region
      _
    $region9: #{tpu_custom_call.1} parent=1 // pred_fallthru
      _
    // Predicated region
    $region10: #{tpu_custom_call.1} parent=1 // pred_check
      _
    $region11: #{tpu_custom_call.1} parent=1 // pred_check_branch
      %15 = sbr.rel (0) target = $region13
    $region12: #{tpu_custom_call.1} parent=1 // pred_region
      _
    $region13: #{tpu_custom_call.1} parent=1 // pred_fallthru
      _
    // Predicated region
    $region14: #{tpu_custom_call.1} parent=1 // pred_check
      _
    $region15: #{tpu_custom_call.1} parent=1 // pred_check_branch
      %17 = sbr.rel (0) target = $region17
    $region16: #{tpu_custom_call.1} parent=1 // pred_region
      _
    $region17: #{tpu_custom_call.1} parent=1 // pred_fallthru
      _
    %v18 = vld [vmem:[%s1] sm:$0xff]
    %v19 = vld [vmem:[%s1 + $0x8] sm:$0xff]
    %v20 = vld [vmem:[%s1 + $0x10] sm:$0xff]
    %v21 = vld [vmem:[%s1 + $0x18] sm:$0xff]
    %v22 = vld [vmem:[%s2] sm:$0xff]
    %v23 = vld [vmem:[%s2 + $0x8] sm:$0xff]
    %v24 = vld [vmem:[%s2 + $0x18] sm:$0xff]
    %v25 = vld [vmem:[%s2 + $0x20] sm:$0xff]
    %v26 = vld [vmem:[%s2 + $0x30] sm:$0xff]
    %v27 = vld [vmem:[%s2 + $0x38] sm:$0xff]
    %v28 = vld [vmem:[%s2 + $0x48] sm:$0xff]
    %v29 = vld [vmem:[%s2 + $0x50] sm:$0xff]
    %v30 = vld [vmem:[%s2 + $0x60] sm:$0xff]
    %v31 = vld [vmem:[%s2 + $0x68] sm:$0xff]
    %v32 = vld [vmem:[%s2 + $0x78] sm:$0xff]
    %v33 = vld [vmem:[%s2 + $0x80] sm:$0xff]
    %v34 = vld [vmem:[%s2 + $0x90] sm:$0xff]
    %v35 = vld [vmem:[%s2 + $0x98] sm:$0xff]
    %v36 = vld [vmem:[%s2 + $0xa8] sm:$0xff]
    %v37 = vld [vmem:[%s2 + $0xb0] sm:$0xff]
    %v38 = vld [vmem:[%s2 + $0xc0] sm:$0xff]
    %v39 = vld [vmem:[%s2 + $0xc8] sm:$0xff]
    %v40 = vld [vmem:[%s2 + $0xd8] sm:$0xff]
    %v41 = vld [vmem:[%s2 + $0xe0] sm:$0xff]
    %v42 = vld [vmem:[%s2 + $0xf0] sm:$0xff]
    %v43 = vld [vmem:[%s2 + $0xf8] sm:$0xff]
    %v44 = vld [vmem:[%s2 + $0x108] sm:$0xff]
    %v45 = vld [vmem:[%s2 + $0x110] sm:$0xff]
    %v46 = vld [vmem:[%s2 + $0x120] sm:$0xff]
    %v47 = vld [vmem:[%s2 + $0x128] sm:$0xff]
    %v48 = vld [vmem:[%s2 + $0x138] sm:$0xff]
    %v49 = vld [vmem:[%s2 + $0x140] sm:$0xff]
    %v50 = vld [vmem:[%s2 + $0x150] sm:$0xff]
    %v51 = vld [vmem:[%s2 + $0x158] sm:$0xff]
    %v52 = vld [vmem:[%s2 + $0x168] sm:$0xff]
    %v53 = vld [vmem:[%s2 + $0x170] sm:$0xff]
    %v54 = vld [vmem:[%s2 + $0x180] sm:$0xff]
    %v55 = vld [vmem:[%s2 + $0x188] sm:$0xff]
    %v56 = vld [vmem:[%s2 + $0x198] sm:$0xff]
    %v57 = vld [vmem:[%s2 + $0x1a0] sm:$0xff]
    %v58 = vld [vmem:[%s2 + $0x1b0] sm:$0xff]
    %v59 = vld [vmem:[%s2 + $0x1b8] sm:$0xff]
    %v60 = vld [vmem:[%s2 + $0x1c8] sm:$0xff]
    %v61 = vld [vmem:[%s2 + $0x1d0] sm:$0xff]
    %v62 = vld [vmem:[%s2 + $0x1e0] sm:$0xff]
    %v63 = vld [vmem:[%s2 + $0x1e8] sm:$0xff]
    %v64 = vld [vmem:[%s2 + $0x1f8] sm:$0xff]
    %v65 = vld [vmem:[%s2 + $0x200] sm:$0xff]
    %v66 = vld [vmem:[%s2 + $0x210] sm:$0xff]
    %v67 = vld [vmem:[%s2 + $0x218] sm:$0xff]
    %v68 = vld [vmem:[%s2 + $0x228] sm:$0xff]
    %v69 = vld [vmem:[%s2 + $0x230] sm:$0xff]
    %v70 = vld [vmem:[%s2 + $0x240] sm:$0xff]
    %v71 = vld [vmem:[%s2 + $0x248] sm:$0xff]
    %v72 = vld [vmem:[%s2 + $0x258] sm:$0xff]
    %v73 = vld [vmem:[%s2 + $0x260] sm:$0xff]
    %v74 = vld [vmem:[%s2 + $0x270] sm:$0xff]
    %v75 = vld [vmem:[%s2 + $0x278] sm:$0xff]
    %v76 = vld [vmem:[%s2 + $0x288] sm:$0xff]
    %v77 = vld [vmem:[%s2 + $0x290] sm:$0xff]
    %v78 = vld [vmem:[%s2 + $0x2a0] sm:$0xff]
    %v79 = vld [vmem:[%s2 + $0x2a8] sm:$0xff]
    %v80 = vld [vmem:[%s2 + $0x2b8] sm:$0xff]
    %v81 = vld [vmem:[%s2 + $0x2c0] sm:$0xff]
    %v82 = vld [vmem:[%s2 + $0x2d0] sm:$0xff]
    %v83 = vld [vmem:[%s2 + $0x2d8] sm:$0xff]
    %v84 = vld [vmem:[%s2 + $0x2e8] sm:$0xff]
    %v85 = vld [vmem:[%s2 + $0x2f0] sm:$0xff]
    %v86 = vld [vmem:[%s2 + $0x10] sm:$0xff]
    %v87 = vld [vmem:[%s2 + $0x28] sm:$0xff]
    %v88 = vld [vmem:[%s2 + $0x40] sm:$0xff]
    %v89 = vld [vmem:[%s2 + $0x58] sm:$0xff]
    %v90 = vld [vmem:[%s2 + $0x70] sm:$0xff]
    %v91 = vld [vmem:[%s2 + $0x88] sm:$0xff]
    %v92 = vld [vmem:[%s2 + $0xa0] sm:$0xff]
    %v93 = vld [vmem:[%s2 + $0xb8] sm:$0xff]
    %v94 = vld [vmem:[%s2 + $0xd0] sm:$0xff]
    %v95 = vld [vmem:[%s2 + $0xe8] sm:$0xff]
    %v96 = vld [vmem:[%s2 + $0x100] sm:$0xff]
    %v97 = vld [vmem:[%s2 + $0x118] sm:$0xff]
    %v98 = vld [vmem:[%s2 + $0x130] sm:$0xff]
    %v99 = vld [vmem:[%s2 + $0x148] sm:$0xff]
    %v100 = vld [vmem:[%s2 + $0x160] sm:$0xff]
    %v101 = vld [vmem:[%s2 + $0x178] sm:$0xff]
    %v102 = vld [vmem:[%s2 + $0x190] sm:$0xff]
    %v103 = vld [vmem:[%s2 + $0x1a8] sm:$0xff]
    %v104 = vld [vmem:[%s2 + $0x1c0] sm:$0xff]
    %v105 = vld [vmem:[%s2 + $0x1d8] sm:$0xff]
    %v106 = vld [vmem:[%s2 + $0x1f0] sm:$0xff]
    %v107 = vld [vmem:[%s2 + $0x208] sm:$0xff]
    %v108 = vld [vmem:[%s2 + $0x220] sm:$0xff]
    %v109 = vld [vmem:[%s2 + $0x238] sm:$0xff]
    %v110 = vld [vmem:[%s2 + $0x250] sm:$0xff]
    %v111 = vld [vmem:[%s2 + $0x268] sm:$0xff]
    %v112 = vld [vmem:[%s2 + $0x280] sm:$0xff]
    %v113 = vld [vmem:[%s2 + $0x298] sm:$0xff]
    %v114 = vld [vmem:[%s2 + $0x2b0] sm:$0xff]
    %v115 = vld [vmem:[%s2 + $0x2c8] sm:$0xff]
    %v116 = vld [vmem:[%s2 + $0x2e0] sm:$0xff]
    %v117 = vld [vmem:[%s2 + $0x2f8] sm:$0xff]
    %v118 = vld [vmem:[%s3] sm:$0x3]
    %v119 = vld [vmem:[%s3 + $0x2] sm:$0x3]
    %v120 = vld [vmem:[%s3 + $0x4] sm:$0x1]
    %v121 = vld [vmem:[%s0] sm:$0xff]
    %v123 = vlaneseq
    %v124 = vshrl.u32 %v123, 7
    %v125 = vsub.s32 0, %v124
    %v126 = vrot.slane %v118, %v125
    %v127 = vlaneseq
    %v128 = vshrl.u32 %v127, 7
    %v129 = vsub.s32 1, %v128
    %v130 = vrot.slane %v118, %v129
    %vm133 = vcmask 130048
    %v135 = vsel %vm133, %v121, 0
    %137 = vmatprep.subr.mxu0 %v19
    %138 = vmatpush1.msra.mxu0 %v18
    %139 = vmatprep.subr.mxu0 %v21
    %140 = vmatpush1.msra.mxu0 %v20
    %141 = vmatprep.subr.mxu0 0.0
    %142 = vmatpush1.msra.mxu0 0.0
    %143 = vmatprep.subr.mxu0 0.0
    %144 = vmatpush1.msra.mxu0 0.0
    %145 = vmatprep.subr.mxu0 0.0
    %146 = vmatpush1.msra.mxu0 0.0
    %147 = vmatprep.subr.mxu0 0.0
    %148 = vmatpush1.msra.mxu0 0.0
    %149 = vmatprep.subr.mxu0 0.0
    %150 = vmatpush1.msra.mxu0 0.0
    %151 = vmatprep.subr.mxu0 0.0
    %152 = vmatpush1.msra.mxu0 0.0
    %153 = vmatprep.subr.mxu0 0.0
    %154 = vmatpush1.msra.mxu0 0.0
    %155 = vmatprep.subr.mxu0 0.0
    %156 = vmatpush1.msra.mxu0 0.0
    %157 = vmatprep.subr.mxu0 0.0
    %158 = vmatpush1.msra.mxu0 0.0
    %159 = vmatprep.subr.mxu0 0.0
    %160 = vmatpush1.msra.mxu0 0.0
    %161 = vmatprep.subr.mxu0 0.0
    %162 = vmatpush1.msra.mxu0 0.0
    %163 = vmatprep.subr.mxu0 0.0
    %164 = vmatpush1.msra.mxu0 0.0
    %165 = vmatprep.subr.mxu0 0.0
    %166 = vmatpush1.msra.mxu0 0.0
    %167 = vmatprep.subr.mxu0 0.0
    %168 = vmatpush1.msra.mxu0 0.0
    %169 = vmatprep.subr.mxu0 0.0
    %170 = vmatpush1.msra.mxu0 0.0
    %171 = vmatprep.subr.mxu0 0.0
    %172 = vmatpush1.msra.mxu0 0.0
    %173 = vmatprep.subr.mxu0 0.0
    %174 = vmatpush1.msra.mxu0 0.0
    %175 = vmatprep.subr.mxu0 0.0
    %176 = vmatpush1.msra.mxu0 0.0
    %177 = vmatprep.subr.mxu0 0.0
    %178 = vmatpush1.msra.mxu0 0.0
    %179 = vmatprep.subr.mxu0 0.0
    %180 = vmatpush1.msra.mxu0 0.0
    %181 = vmatprep.subr.mxu0 0.0
    %182 = vmatpush1.msra.mxu0 0.0
    %183 = vmatprep.subr.mxu0 0.0
    %184 = vmatpush1.msra.mxu0 0.0
    %185 = vmatprep.subr.mxu0 0.0
    %186 = vmatpush1.msra.mxu0 0.0
    %187 = vmatprep.subr.mxu0 0.0
    %188 = vmatpush1.msra.mxu0 0.0
    %189 = vmatprep.subr.mxu0 0.0
    %190 = vmatpush1.msra.mxu0 0.0
    %191 = vmatprep.subr.mxu0 0.0
    %192 = vmatpush1.msra.mxu0 0.0
    %193 = vmatprep.subr.mxu0 0.0
    %194 = vmatpush1.msra.mxu0 0.0
    %195 = vmatprep.subr.mxu0 0.0
    %196 = vmatpush1.msra.mxu0 0.0
    %197 = vmatprep.subr.mxu0 0.0
    %198 = vmatpush1.msra.mxu0 0.0
    %199 = vmatprep.subr.mxu0 0.0
    %200 = vmatpush1.msra.mxu0 0.0
    %201 = vmatprep.mubr.f32.mxu0 0.0
    %202 = vmatmul.mubr.f32.gmra.mrb[0].mxu0 %v135
    %v203 = vpop.f32.mrb[0].mxu0
    %v204 = vadd.f32 %v126, %v203
    %v205 = vpop.f32.mrb[0].mxu0
    %v206 = vadd.f32 %v130, %v205
    %207 = vdwg.mxu0
    %v208 = vmax.f32 %v204, 0.0
    %v209 = vmax.f32 %v206, 0.0
    %v211 = vlaneseq
    %v212 = vshrl.u32 %v211, 7
    %v213 = vsub.s32 0, %v212
    %v214 = vrot.slane %v119, %v213
    %v215 = vlaneseq
    %v216 = vshrl.u32 %v215, 7
    %v217 = vsub.s32 1, %v216
    %v218 = vrot.slane %v119, %v217
    %221 = vmatprep.subr.mxu0 %v23
    %222 = vmatpush1.msra.mxu0 %v22
    %223 = vmatprep.subr.mxu0 %v25
    %224 = vmatpush1.msra.mxu0 %v24
    %225 = vmatprep.subr.mxu0 %v27
    %226 = vmatpush1.msra.mxu0 %v26
    %227 = vmatprep.subr.mxu0 %v29
    %228 = vmatpush1.msra.mxu0 %v28
    %229 = vmatprep.subr.mxu0 %v31
    %230 = vmatpush1.msra.mxu0 %v30
    %231 = vmatprep.subr.mxu0 %v33
    %232 = vmatpush1.msra.mxu0 %v32
    %233 = vmatprep.subr.mxu0 %v35
    %234 = vmatpush1.msra.mxu0 %v34
    %235 = vmatprep.subr.mxu0 %v37
    %236 = vmatpush1.msra.mxu0 %v36
    %237 = vmatprep.subr.mxu0 %v39
    %238 = vmatpush1.msra.mxu0 %v38
    %239 = vmatprep.subr.mxu0 %v41
    %240 = vmatpush1.msra.mxu0 %v40
    %241 = vmatprep.subr.mxu0 %v43
    %242 = vmatpush1.msra.mxu0 %v42
    %243 = vmatprep.subr.mxu0 %v45
    %244 = vmatpush1.msra.mxu0 %v44
    %245 = vmatprep.subr.mxu0 %v47
    %246 = vmatpush1.msra.mxu0 %v46
    %247 = vmatprep.subr.mxu0 %v49
    %248 = vmatpush1.msra.mxu0 %v48
    %249 = vmatprep.subr.mxu0 %v51
    %250 = vmatpush1.msra.mxu0 %v50
    %251 = vmatprep.subr.mxu0 %v53
    %252 = vmatpush1.msra.mxu0 %v52
    %253 = vmatprep.subr.mxu0 %v55
    %254 = vmatpush1.msra.mxu0 %v54
    %255 = vmatprep.subr.mxu0 %v57
    %256 = vmatpush1.msra.mxu0 %v56
    %257 = vmatprep.subr.mxu0 %v59
    %258 = vmatpush1.msra.mxu0 %v58
    %259 = vmatprep.subr.mxu0 %v61
    %260 = vmatpush1.msra.mxu0 %v60
    %261 = vmatprep.subr.mxu0 %v63
    %262 = vmatpush1.msra.mxu0 %v62
    %263 = vmatprep.subr.mxu0 %v65
    %264 = vmatpush1.msra.mxu0 %v64
    %265 = vmatprep.subr.mxu0 %v67
    %266 = vmatpush1.msra.mxu0 %v66
    %267 = vmatprep.subr.mxu0 %v69
    %268 = vmatpush1.msra.mxu0 %v68
    %269 = vmatprep.subr.mxu0 %v71
    %270 = vmatpush1.msra.mxu0 %v70
    %271 = vmatprep.subr.mxu0 %v73
    %272 = vmatpush1.msra.mxu0 %v72
    %273 = vmatprep.subr.mxu0 %v75
    %274 = vmatpush1.msra.mxu0 %v74
    %275 = vmatprep.subr.mxu0 %v77
    %276 = vmatpush1.msra.mxu0 %v76
    %277 = vmatprep.subr.mxu0 %v79
    %278 = vmatpush1.msra.mxu0 %v78
    %279 = vmatprep.subr.mxu0 %v81
    %280 = vmatpush1.msra.mxu0 %v80
    %281 = vmatprep.subr.mxu0 %v83
    %282 = vmatpush1.msra.mxu0 %v82
    %283 = vmatprep.subr.mxu0 %v85
    %284 = vmatpush1.msra.mxu0 %v84
    %285 = vmatprep.mubr.f32.mxu0 %v209
    %286 = vmatmul.mubr.f32.gmra.mrb[0].mxu0 %v208
    %v287 = vpop.f32.mrb[0].mxu0
    %v288 = vadd.f32 %v214, %v287
    %v289 = vpop.f32.mrb[0].mxu0
    %v290 = vadd.f32 %v218, %v289
    %291 = vdwg.mxu0
    %v292 = vmax.f32 %v288, 0.0
    %v293 = vmax.f32 %v290, 0.0
    %v295 = vlaneseq
    %v296 = vshrl.u32 %v295, 7
    %v297 = vsub.s32 0, %v296
    %v298 = vrot.slane %v120, %v297
    %300 = vmatprep.subr.mxu0 0.0
    %301 = vmatpush1.msra.mxu0 %v86
    %302 = vmatprep.subr.mxu0 0.0
    %303 = vmatpush1.msra.mxu0 %v87
    %304 = vmatprep.subr.mxu0 0.0
    %305 = vmatpush1.msra.mxu0 %v88
    %306 = vmatprep.subr.mxu0 0.0
    %307 = vmatpush1.msra.mxu0 %v89
    %308 = vmatprep.subr.mxu0 0.0
    %309 = vmatpush1.msra.mxu0 %v90
    %310 = vmatprep.subr.mxu0 0.0
    %311 = vmatpush1.msra.mxu0 %v91
    %312 = vmatprep.subr.mxu0 0.0
    %313 = vmatpush1.msra.mxu0 %v92
    %314 = vmatprep.subr.mxu0 0.0
    %315 = vmatpush1.msra.mxu0 %v93
    %316 = vmatprep.subr.mxu0 0.0
    %317 = vmatpush1.msra.mxu0 %v94
    %318 = vmatprep.subr.mxu0 0.0
    %319 = vmatpush1.msra.mxu0 %v95
    %320 = vmatprep.subr.mxu0 0.0
    %321 = vmatpush1.msra.mxu0 %v96
    %322 = vmatprep.subr.mxu0 0.0
    %323 = vmatpush1.msra.mxu0 %v97
    %324 = vmatprep.subr.mxu0 0.0
    %325 = vmatpush1.msra.mxu0 %v98
    %326 = vmatprep.subr.mxu0 0.0
    %327 = vmatpush1.msra.mxu0 %v99
    %328 = vmatprep.subr.mxu0 0.0
    %329 = vmatpush1.msra.mxu0 %v100
    %330 = vmatprep.subr.mxu0 0.0
    %331 = vmatpush1.msra.mxu0 %v101
    %332 = vmatprep.subr.mxu0 0.0
    %333 = vmatpush1.msra.mxu0 %v102
    %334 = vmatprep.subr.mxu0 0.0
    %335 = vmatpush1.msra.mxu0 %v103
    %336 = vmatprep.subr.mxu0 0.0
    %337 = vmatpush1.msra.mxu0 %v104
    %338 = vmatprep.subr.mxu0 0.0
    %339 = vmatpush1.msra.mxu0 %v105
    %340 = vmatprep.subr.mxu0 0.0
    %341 = vmatpush1.msra.mxu0 %v106
    %342 = vmatprep.subr.mxu0 0.0
    %343 = vmatpush1.msra.mxu0 %v107
    %344 = vmatprep.subr.mxu0 0.0
    %345 = vmatpush1.msra.mxu0 %v108
    %346 = vmatprep.subr.mxu0 0.0
    %347 = vmatpush1.msra.mxu0 %v109
    %348 = vmatprep.subr.mxu0 0.0
    %349 = vmatpush1.msra.mxu0 %v110
    %350 = vmatprep.subr.mxu0 0.0
    %351 = vmatpush1.msra.mxu0 %v111
    %352 = vmatprep.subr.mxu0 0.0
    %353 = vmatpush1.msra.mxu0 %v112
    %354 = vmatprep.subr.mxu0 0.0
    %355 = vmatpush1.msra.mxu0 %v113
    %356 = vmatprep.subr.mxu0 0.0
    %357 = vmatpush1.msra.mxu0 %v114
    %358 = vmatprep.subr.mxu0 0.0
    %359 = vmatpush1.msra.mxu0 %v115
    %360 = vmatprep.subr.mxu0 0.0
    %361 = vmatpush1.msra.mxu0 %v116
    %362 = vmatprep.subr.mxu0 0.0
    %363 = vmatpush1.msra.mxu0 %v117
    %364 = vmatprep.mubr.f32.mxu0 %v293
    %365 = vmatmul.mubr.f32.gmra.mrb[0].mxu0 %v292
    %v366 = vpop.f32.mrb[0].mxu0
    %v367 = vadd.f32 %v298, %v366
    %v368 = vpop.f32.mrb[0].mxu0
    %369 = vdwg.mxu0
    %v370 = vtanh.pop %v367
    %v371 = vmul.f32 %v370, 3.5
    %v372 = vadd.f32 %v371, -1.5
    %v373 = vlaneseq
    %v374 = vand.u32 %v373, 127
    %vm375 = vcmp.lt.s32.totalorder %v374, 4
    %v376 = vsel %vm375, %v367, %v372
    %vm377 = vcmask 64512
    %378 = vst.msk [vmem:[#allocation2] sm:$0xff] %vm377, %v376
    // Predicated region
    $region18: #{tpu_custom_call.1} parent=1 // pred_check
      _
    $region19: #{tpu_custom_call.1} parent=1 // pred_check_branch
      %380 = sbr.rel (0) target = $region21
    $region20: #{tpu_custom_call.1} parent=1 // pred_region
      %s382 = ssub.s32 128, 128
      %383 = vsyncadd [#allocation3], %s382
      %s385 = sshll.u32 [#allocation2], 4
      %s386 = int_to_ptr.vmem [resolvable:$true] %s385
      %388 = dma.vmem_to_hbm [thread:$0]  %s386, 128, %s4, [#allocation3]
    $region21: #{tpu_custom_call.1} parent=1 // pred_fallthru
      _
    // Predicated region
    $region22: #{tpu_custom_call.1} parent=1 // pred_check
      _
    $region23: #{tpu_custom_call.1} parent=1 // pred_check_branch
      %390 = sbr.rel (0) target = $region25
    $region24: #{tpu_custom_call.1} parent=1 // pred_region
      %391 = dma.done [#allocation3], 128
    $region25: #{tpu_custom_call.1} parent=1 // pred_fallthru
      _
    %392 = vsyncpa [#allocation3], 1

</llo_original>
